<compile_context>
chip_gen: v5e
topology: v5e:2x2
jax: 0.10.0
libtpu: 0.0.40
codegen_flags: <defaults>
</compile_context>

<pallas_src>
import math

import jax
import jax.numpy as jnp
import numpy as np
from jax.experimental import pallas as pl
from jax.experimental.pallas import tpu as pltpu

EPS = 1e-8
HALF_LOG_2PI = 0.5 * math.log(2.0 * math.pi)
INV_SQRT2 = 1.0 / math.sqrt(2.0)


def tpp_kernel(times_ref, mask_ref, whh_ref, rnnin_ref, lin_ref, out_ref,
               xc_ref, hist_ref):
    """Batch-on-lanes NeuralTPP log-likelihood for one batch tile.

    times_ref, mask_ref : (S, TB)      batch on the 128-lane axis
    whh_ref             : (H, H)       W_hh, resident
    rnnin_ref           : (S*H, 2S+1)  [kron(I_S, W_ih[:,0]) | kron(I_S, W_ih[:,1]) | tiled b]
    lin_ref             : (2S, S*H+1)  [kron(I_S, w_mu); kron(I_S, w_sig)] | bias column
    out_ref             : (1, TB)      lane-dense output block
    xc_ref, hist_ref    : (S*H, TB)    VMEM scratch (input projection / hidden-state stash)
    """
    S, TB = times_ref.shape
    H = whh_ref.shape[0]
    SH = S * H

    times = jnp.maximum(times_ref[...], EPS)                     # (S, TB)
    logt = jnp.log(times)
    mask = mask_ref[...].astype(jnp.float32)                     # int8 -> f32 in-kernel

    # ---- fully hoisted input projection + bias: ONE MXU op for all S steps -------
    feat = jnp.concatenate([times, logt], axis=0)                # (2S, TB) sublane concat
    xc_ref[...] = (jnp.dot(rnnin_ref[:, 0:2 * S], feat,
                           preferred_element_type=jnp.float32)
                   + rnnin_ref[:, 2 * S:2 * S + 1])              # (S*H, TB)

    # ---- serial recurrence: ONLY tanh(xc_t + W_hh @ h) stays in the loop ----------
    # Per-step hidden states go straight to the VMEM scratch: one live h, no concat.
    w_hh = whh_ref[...]
    h = jnp.zeros((H, TB), jnp.float32)
    for t in range(S):
        hist_ref[t * H:(t + 1) * H, :] = h                       # history BEFORE step t
        if t + 1 < S:                                            # last update is never used
            if t == 0:                                           # h == 0 -> skip the matmul
                h = jnp.tanh(xc_ref[0:H, :])
            else:
                h = jnp.tanh(xc_ref[t * H:(t + 1) * H, :]
                             + jnp.dot(w_hh, h, preferred_element_type=jnp.float32))

    # ---- hoisted likelihood: single fused (mu & log_sigma) matmul over all steps --
    hist = hist_ref[...]                                         # (S*H, TB)
    ms = (jnp.dot(lin_ref[:, 0:SH], hist, preferred_element_type=jnp.float32)
          + lin_ref[:, SH:SH + 1])                               # (2S, TB)
    mu = ms[0:S, :]
    log_sigma = ms[S:2 * S, :]

    inv_sigma = jnp.exp(-log_sigma)                              # no exp->log, no divide
    z = (logt - mu) * inv_sigma
    logp = -0.5 * z * z - log_sigma - HALF_LOG_2PI - logt        # LogNormal log_prob
    cdf = 0.5 * (1.0 + jax.lax.erf(z * INV_SQRT2))               # LogNormal cdf
    logp_m = logp * mask

    # one-hot of the last valid step (int compare; all-zero row if mask is empty)
    last_idx = (jnp.sum(mask, axis=0, keepdims=True) - 1.0).astype(jnp.int32)   # (1, TB)
    step_id = jax.lax.broadcasted_iota(jnp.int32, (S, TB), 0)                   # (S, TB)
    onehot = (step_id == last_idx).astype(jnp.float32)

    log_density = (jnp.sum(logp_m, axis=0, keepdims=True)
                   - jnp.sum(onehot * logp_m, axis=0, keepdims=True))           # (1, TB)
    cdf_last = jnp.sum(onehot * cdf, axis=0, keepdims=True)
    # TODO(synk): log(1 - cdf) matches the reference but cancels for large z; a
    #             log(0.5*erfc(z/sqrt(2))) survival would be the numerically safe form.
    log_survival = jnp.log(1.0 - cdf_last)

    out_ref[...] = log_density + log_survival                    # lane-dense (1, TB) store


def neural_tpp_log_likelihood(times, mask, params, tb=128):
    """times: (B, S) f32, mask: (B, S) bool -> (B,) f32 log-likelihood."""
    B, S = times.shape
    H = params["w_hh"].shape[0]
    if tb % 128 != 0:
        raise ValueError("tb must be a multiple of 128 (batch lives on the lane axis)")

    # pad batch to the tile; padded lanes carry an all-False mask -> finite garbage,
    # sliced off below.
    b_pad = ((B + tb - 1) // tb) * tb
    if b_pad != B:
        times = jnp.pad(times, ((0, b_pad - B), (0, 0)))
        mask = jnp.pad(mask, ((0, b_pad - B), (0, 0)))

    # batch-on-lanes layout: wrapper-side layout plumbing, done once
    times_t = times.T                                            # (S, b_pad) f32
    mask_t = mask.astype(jnp.int8).T                             # (S, b_pad) int8

    # ---- pack parameters into 3 small resident VMEM buffers -----------------------
    eye_s = jnp.eye(S, dtype=jnp.float32)
    w_ih = params["w_ih"].astype(jnp.float32)                    # (H, 2)
    b_rnn = (params["b_ih"] + params["b_hh"]).reshape(H, 1).astype(jnp.float32)
    # input projection for ALL steps at once (block-diagonal kron) + tiled bias column
    rnn_in = jnp.concatenate(
        [jnp.kron(eye_s, w_ih[:, 0:1]),                          # (S*H, S): feature "t"
         jnp.kron(eye_s, w_ih[:, 1:2]),                          # (S*H, S): feature "log t"
         jnp.tile(b_rnn, (S, 1))], axis=1)                       # (S*H, 2S+1)

    # fused (mu ; log_sigma) linear applied to every step at once + bias column
    # TODO(synk): this kron is O(S^2*H); for long sequences switch to a
    #             (S*TB, H) @ (H, 2) formulation to stay inside v7x's 64 MiB VMEM.
    w_mu = params["w_lin"][0:1, :].astype(jnp.float32)           # (1, H)
    w_sig = params["w_lin"][1:2, :].astype(jnp.float32)          # (1, H)
    b_col = jnp.concatenate(
        [jnp.full((S, 1), params["b_lin"][0], jnp.float32),
         jnp.full((S, 1), params["b_lin"][1], jnp.float32)], axis=0)            # (2S, 1)
    lin = jnp.concatenate(
        [jnp.concatenate([jnp.kron(eye_s, w_mu),
                          jnp.kron(eye_s, w_sig)], axis=0),                     # (2S, S*H)
         b_col], axis=1)                                                        # (2S, S*H+1)

    grid = (b_pad // tb,)
    out = pl.pallas_call(
        tpp_kernel,
        out_shape=jax.ShapeDtypeStruct((1, b_pad), jnp.float32),
        grid=grid,
        in_specs=[
            pl.BlockSpec((S, tb), lambda i: (0, i)),             # times (lanes = batch)
            pl.BlockSpec((S, tb), lambda i: (0, i)),             # mask  (int8)
            pl.BlockSpec((H, H), lambda i: (0, 0)),              # W_hh: resident
            pl.BlockSpec((S * H, 2 * S + 1), lambda i: (0, 0)),  # input-proj kron: resident
            pl.BlockSpec((2 * S, S * H + 1), lambda i: (0, 0)),  # output-linear kron: resident
        ],
        out_specs=pl.BlockSpec((1, tb), lambda i: (0, i)),       # lane-dense output block
        scratch_shapes=[pltpu.VMEM((S * H, tb), jnp.float32),    # xc (input projection)
                        pltpu.VMEM((S * H, tb), jnp.float32)],   # hidden-state stash
        compiler_params=pltpu.CompilerParams(
            dimension_semantics=("parallel",)),                  # batch tiles independent
    )(times_t, mask_t, params["w_hh"].astype(jnp.float32), rnn_in, lin)
    return out[0, :B]


def neural_tpp_reference(times, mask, params):
    """Pure-JAX reference with identical semantics (for validation)."""
    times = jnp.maximum(times, EPS)
    mask_f = mask.astype(jnp.float32)
    B, S = times.shape
    H = params["w_hh"].shape[0]
    x = jnp.stack([times, jnp.log(times)], axis=-1)              # (B, S, 2)

    def step(h, x_t):
        h_new = jnp.tanh(x_t @ params["w_ih"].T + h @ params["w_hh"].T
                         + params["b_ih"] + params["b_hh"])
        return h_new, h_new

    h0 = jnp.zeros((B, H), jnp.float32)
    _, outs = jax.lax.scan(step, h0, jnp.swapaxes(x, 0, 1))      # (S, B, H)
    outs = jnp.swapaxes(outs, 0, 1)                              # (B, S, H)
    hist = jnp.concatenate([jnp.zeros((B, 1, H)), outs[:, :-1]], axis=1)

    ms = hist @ params["w_lin"].T + params["b_lin"]              # (B, S, 2)
    mu, sigma = ms[..., 0], jnp.exp(ms[..., 1])
    logt = jnp.log(times)
    z = (logt - mu) / sigma
    logp = -0.5 * z * z - jnp.log(sigma) - 0.5 * math.log(2 * math.pi) - logt
    cdf = 0.5 * (1.0 + jax.lax.erf(z / math.sqrt(2.0)))

    logp = jnp.where(mask, logp, 0.0)
    last = (jnp.sum(mask_f, axis=1) - 1.0).astype(jnp.int32)
    last_logp = jnp.take_along_axis(logp, last[:, None], axis=1)[:, 0]
    last_cdf = jnp.take_along_axis(cdf, last[:, None], axis=1)[:, 0]
    return jnp.sum(logp, axis=1) - last_logp + jnp.log(1.0 - last_cdf)


def init_params(key, hidden_dim=16):
    """Deterministic init matching torch default U(-1/sqrt(H), 1/sqrt(H))."""
    k = 1.0 / math.sqrt(hidden_dim)
    ks = jax.random.split(key, 6)
    u = lambda kk, shape: jax.random.uniform(kk, shape, jnp.float32, -k, k)
    return {
        "w_ih": u(ks[0], (hidden_dim, 2)),       # RNN weight_ih_l0  (H, 2)
        "w_hh": u(ks[1], (hidden_dim, hidden_dim)),
        "b_ih": u(ks[2], (hidden_dim,)),
        "b_hh": u(ks[3], (hidden_dim,)),
        "w_lin": u(ks[4], (2, hidden_dim)),      # Linear(hidden, 2)
        "b_lin": u(ks[5], (2,)),
    }


if __name__ == "__main__":
    key = jax.random.PRNGKey(0)
    B, S, H = 4, 8, 16

    k_p, k_t = jax.random.split(key)
    params = init_params(k_p, hidden_dim=H)

    # positive inter-event times, contiguous-prefix mask (seq_len+1 valid entries)
    times = jax.random.uniform(k_t, (B, S), jnp.float32, 0.1, 2.0)
    lengths = jnp.array([8, 5, 7, 3], dtype=jnp.int32)
    mask = jnp.arange(S)[None, :] < lengths[:, None]             # (B, S) bool

    out = neural_tpp_log_likelihood(times, mask, params)
    out = jax.block_until_ready(out)

    ref = neural_tpp_reference(times, mask, params)
    np.testing.assert_allclose(np.asarray(out), np.asarray(ref), rtol=1e-4, atol=1e-4)

    print("KERNEL_OK")
</pallas_src>

<mosaic_0001>
module attributes {stable_mosaic.version = 11 : i64} {
  func.func @tpp_kernel(%arg0: i32, %arg1: memref<8x128xf32, #tpu.memory_space<vmem>>, %arg2: memref<8x128xi8, #tpu.memory_space<vmem>>, %arg3: memref<16x16xf32, #tpu.memory_space<vmem>>, %arg4: memref<128x17xf32, #tpu.memory_space<vmem>>, %arg5: memref<16x129xf32, #tpu.memory_space<vmem>>, %arg6: memref<1x128xf32, #tpu.memory_space<vmem>>, %arg7: memref<128x128xf32, #tpu.memory_space<vmem>>, %arg8: memref<128x128xf32, #tpu.memory_space<vmem>>) attributes {dimension_semantics = [#tpu.dimension_semantics<parallel>], iteration_bounds = array<i64: 1>, scalar_prefetch = 0 : i64, scratch_operands = 2 : i64, tpu.core_type = #tpu.core_type<tc>, window_params = [{transform_indices = @transform_0, window_bounds = array<i64: 8, 128>}, {transform_indices = @transform_1, window_bounds = array<i64: 8, 128>}, {pipeline_mode = #tpu.pipeline_mode<synchronous>, transform_indices = @transform_2, window_bounds = array<i64: 16, 16>}, {pipeline_mode = #tpu.pipeline_mode<synchronous>, transform_indices = @transform_3, window_bounds = array<i64: 128, 17>}, {pipeline_mode = #tpu.pipeline_mode<synchronous>, transform_indices = @transform_4, window_bounds = array<i64: 16, 129>}, {transform_indices = @transform_5, window_bounds = array<i64: 1, 128>}]} {
    %c0 = arith.constant 0 : index
    %c0_0 = arith.constant 0 : index
    %0 = vector.load %arg1[%c0, %c0_0] : memref<8x128xf32, #tpu.memory_space<vmem>>, vector<8x128xf32>
    %cst = arith.constant 9.99999993E-9 : f32
    %1 = vector.broadcast %cst : f32 to vector<8x128xf32>
    %2 = arith.maximumf %0, %1 : vector<8x128xf32>
    %3 = math.log %2 : vector<8x128xf32>
    %c0_1 = arith.constant 0 : index
    %c0_2 = arith.constant 0 : index
    %4 = vector.load %arg2[%c0_1, %c0_2] : memref<8x128xi8, #tpu.memory_space<vmem>>, vector<8x128xi8>
    %5 = arith.sitofp %4 : vector<8x128xi8> to vector<8x128xf32>
    %6 = tpu.concatenate %2, %3 in 0 : vector<8x128xf32>, vector<8x128xf32> -> vector<16x128xf32>
    %c0_3 = arith.constant 0 : index
    %c0_4 = arith.constant 0 : index
    %7 = vector.load %arg4[%c0_3, %c0_4] : memref<128x17xf32, #tpu.memory_space<vmem>>, vector<128x16xf32>
    %cst_5 = arith.constant dense<0.000000e+00> : vector<128x128xf32>
    %8 = tpu.matmul %7, %6, %cst_5 {dimension_numbers = #tpu.dot_dimension_numbers<[1], [0], [0], [1], [0, 0, 1, 1], [], []>} : vector<128x16xf32>, vector<16x128xf32>, vector<128x128xf32> -> vector<128x128xf32>
    %c0_6 = arith.constant 0 : index
    %c16 = arith.constant 16 : index
    %9 = vector.load %arg4[%c0_6, %c16] : memref<128x17xf32, #tpu.memory_space<vmem>>, vector<128x1xf32>
    %10 = vector.broadcast %9 : vector<128x1xf32> to vector<128x128xf32>
    %11 = arith.addf %8, %10 : vector<128x128xf32>
    %c0_7 = arith.constant 0 : index
    %c0_8 = arith.constant 0 : index
    %12 = vector.load %arg7[%c0_7, %c0_8] : memref<128x128xf32, #tpu.memory_space<vmem>>, vector<128x128xf32>
    tpu.vector_store %arg7[%c0_7, %c0_8], %11 {strides = array<i32>} : memref<128x128xf32, #tpu.memory_space<vmem>>, vector<128x128xf32>,
    %c0_9 = arith.constant 0 : index
    %c0_10 = arith.constant 0 : index
    %13 = vector.load %arg3[%c0_9, %c0_10] : memref<16x16xf32, #tpu.memory_space<vmem>>, vector<16x16xf32>
    %cst_11 = arith.constant 0.000000e+00 : f32
    %14 = vector.broadcast %cst_11 : f32 to vector<16x128xf32>
    %c0_12 = arith.constant 0 : index
    %c0_13 = arith.constant 0 : index
    %15 = vector.load %arg8[%c0_12, %c0_13] : memref<128x128xf32, #tpu.memory_space<vmem>>, vector<16x128xf32>
    tpu.vector_store %arg8[%c0_12, %c0_13], %14 {strides = array<i32>} : memref<128x128xf32, #tpu.memory_space<vmem>>, vector<16x128xf32>,
    %c0_14 = arith.constant 0 : index
    %c0_15 = arith.constant 0 : index
    %16 = vector.load %arg7[%c0_14, %c0_15] : memref<128x128xf32, #tpu.memory_space<vmem>>, vector<16x128xf32>
    %17 = math.tanh %16 : vector<16x128xf32>
    %c16_16 = arith.constant 16 : index
    %c0_17 = arith.constant 0 : index
    %18 = vector.load %arg8[%c16_16, %c0_17] : memref<128x128xf32, #tpu.memory_space<vmem>>, vector<16x128xf32>
    tpu.vector_store %arg8[%c16_16, %c0_17], %17 {strides = array<i32>} : memref<128x128xf32, #tpu.memory_space<vmem>>, vector<16x128xf32>,
    %c16_18 = arith.constant 16 : index
    %c0_19 = arith.constant 0 : index
    %19 = vector.load %arg7[%c16_18, %c0_19] : memref<128x128xf32, #tpu.memory_space<vmem>>, vector<16x128xf32>
    %cst_20 = arith.constant dense<0.000000e+00> : vector<16x128xf32>
    %20 = tpu.matmul %13, %17, %cst_20 {dimension_numbers = #tpu.dot_dimension_numbers<[1], [0], [0], [1], [0, 0, 1, 1], [], []>} : vector<16x16xf32>, vector<16x128xf32>, vector<16x128xf32> -> vector<16x128xf32>
    %21 = arith.addf %19, %20 : vector<16x128xf32>
    %22 = math.tanh %21 : vector<16x128xf32>
    %c32 = arith.constant 32 : index
    %c0_21 = arith.constant 0 : index
    %23 = vector.load %arg8[%c32, %c0_21] : memref<128x128xf32, #tpu.memory_space<vmem>>, vector<16x128xf32>
    tpu.vector_store %arg8[%c32, %c0_21], %22 {strides = array<i32>} : memref<128x128xf32, #tpu.memory_space<vmem>>, vector<16x128xf32>,
    %c32_22 = arith.constant 32 : index
    %c0_23 = arith.constant 0 : index
    %24 = vector.load %arg7[%c32_22, %c0_23] : memref<128x128xf32, #tpu.memory_space<vmem>>, vector<16x128xf32>
    %cst_24 = arith.constant dense<0.000000e+00> : vector<16x128xf32>
    %25 = tpu.matmul %13, %22, %cst_24 {dimension_numbers = #tpu.dot_dimension_numbers<[1], [0], [0], [1], [0, 0, 1, 1], [], []>} : vector<16x16xf32>, vector<16x128xf32>, vector<16x128xf32> -> vector<16x128xf32>
    %26 = arith.addf %24, %25 : vector<16x128xf32>
    %27 = math.tanh %26 : vector<16x128xf32>
    %c48 = arith.constant 48 : index
    %c0_25 = arith.constant 0 : index
    %28 = vector.load %arg8[%c48, %c0_25] : memref<128x128xf32, #tpu.memory_space<vmem>>, vector<16x128xf32>
    tpu.vector_store %arg8[%c48, %c0_25], %27 {strides = array<i32>} : memref<128x128xf32, #tpu.memory_space<vmem>>, vector<16x128xf32>,
    %c48_26 = arith.constant 48 : index
    %c0_27 = arith.constant 0 : index
    %29 = vector.load %arg7[%c48_26, %c0_27] : memref<128x128xf32, #tpu.memory_space<vmem>>, vector<16x128xf32>
    %cst_28 = arith.constant dense<0.000000e+00> : vector<16x128xf32>
    %30 = tpu.matmul %13, %27, %cst_28 {dimension_numbers = #tpu.dot_dimension_numbers<[1], [0], [0], [1], [0, 0, 1, 1], [], []>} : vector<16x16xf32>, vector<16x128xf32>, vector<16x128xf32> -> vector<16x128xf32>
    %31 = arith.addf %29, %30 : vector<16x128xf32>
    %32 = math.tanh %31 : vector<16x128xf32>
    %c64 = arith.constant 64 : index
    %c0_29 = arith.constant 0 : index
    %33 = vector.load %arg8[%c64, %c0_29] : memref<128x128xf32, #tpu.memory_space<vmem>>, vector<16x128xf32>
    tpu.vector_store %arg8[%c64, %c0_29], %32 {strides = array<i32>} : memref<128x128xf32, #tpu.memory_space<vmem>>, vector<16x128xf32>,
    %c64_30 = arith.constant 64 : index
    %c0_31 = arith.constant 0 : index
    %34 = vector.load %arg7[%c64_30, %c0_31] : memref<128x128xf32, #tpu.memory_space<vmem>>, vector<16x128xf32>
    %cst_32 = arith.constant dense<0.000000e+00> : vector<16x128xf32>
    %35 = tpu.matmul %13, %32, %cst_32 {dimension_numbers = #tpu.dot_dimension_numbers<[1], [0], [0], [1], [0, 0, 1, 1], [], []>} : vector<16x16xf32>, vector<16x128xf32>, vector<16x128xf32> -> vector<16x128xf32>
    %36 = arith.addf %34, %35 : vector<16x128xf32>
    %37 = math.tanh %36 : vector<16x128xf32>
    %c80 = arith.constant 80 : index
    %c0_33 = arith.constant 0 : index
    %38 = vector.load %arg8[%c80, %c0_33] : memref<128x128xf32, #tpu.memory_space<vmem>>, vector<16x128xf32>
    tpu.vector_store %arg8[%c80, %c0_33], %37 {strides = array<i32>} : memref<128x128xf32, #tpu.memory_space<vmem>>, vector<16x128xf32>,
    %c80_34 = arith.constant 80 : index
    %c0_35 = arith.constant 0 : index
    %39 = vector.load %arg7[%c80_34, %c0_35] : memref<128x128xf32, #tpu.memory_space<vmem>>, vector<16x128xf32>
    %cst_36 = arith.constant dense<0.000000e+00> : vector<16x128xf32>
    %40 = tpu.matmul %13, %37, %cst_36 {dimension_numbers = #tpu.dot_dimension_numbers<[1], [0], [0], [1], [0, 0, 1, 1], [], []>} : vector<16x16xf32>, vector<16x128xf32>, vector<16x128xf32> -> vector<16x128xf32>
    %41 = arith.addf %39, %40 : vector<16x128xf32>
    %42 = math.tanh %41 : vector<16x128xf32>
    %c96 = arith.constant 96 : index
    %c0_37 = arith.constant 0 : index
    %43 = vector.load %arg8[%c96, %c0_37] : memref<128x128xf32, #tpu.memory_space<vmem>>, vector<16x128xf32>
    tpu.vector_store %arg8[%c96, %c0_37], %42 {strides = array<i32>} : memref<128x128xf32, #tpu.memory_space<vmem>>, vector<16x128xf32>,
    %c96_38 = arith.constant 96 : index
    %c0_39 = arith.constant 0 : index
    %44 = vector.load %arg7[%c96_38, %c0_39] : memref<128x128xf32, #tpu.memory_space<vmem>>, vector<16x128xf32>
    %cst_40 = arith.constant dense<0.000000e+00> : vector<16x128xf32>
    %45 = tpu.matmul %13, %42, %cst_40 {dimension_numbers = #tpu.dot_dimension_numbers<[1], [0], [0], [1], [0, 0, 1, 1], [], []>} : vector<16x16xf32>, vector<16x128xf32>, vector<16x128xf32> -> vector<16x128xf32>
    %46 = arith.addf %44, %45 : vector<16x128xf32>
    %47 = math.tanh %46 : vector<16x128xf32>
    %c112 = arith.constant 112 : index
    %c0_41 = arith.constant 0 : index
    %48 = vector.load %arg8[%c112, %c0_41] : memref<128x128xf32, #tpu.memory_space<vmem>>, vector<16x128xf32>
    tpu.vector_store %arg8[%c112, %c0_41], %47 {strides = array<i32>} : memref<128x128xf32, #tpu.memory_space<vmem>>, vector<16x128xf32>,
    %c0_42 = arith.constant 0 : index
    %c0_43 = arith.constant 0 : index
    %49 = vector.load %arg8[%c0_42, %c0_43] : memref<128x128xf32, #tpu.memory_space<vmem>>, vector<128x128xf32>
    %c0_44 = arith.constant 0 : index
    %c0_45 = arith.constant 0 : index
    %50 = vector.load %arg5[%c0_44, %c0_45] : memref<16x129xf32, #tpu.memory_space<vmem>>, vector<16x128xf32>
    %cst_46 = arith.constant dense<0.000000e+00> : vector<16x128xf32>
    %51 = tpu.matmul %50, %49, %cst_46 {dimension_numbers = #tpu.dot_dimension_numbers<[1], [0], [0], [1], [0, 0, 1, 1], [], []>} : vector<16x128xf32>, vector<128x128xf32>, vector<16x128xf32> -> vector<16x128xf32>
    %c0_47 = arith.constant 0 : index
    %c128 = arith.constant 128 : index
    %52 = vector.load %arg5[%c0_47, %c128] : memref<16x129xf32, #tpu.memory_space<vmem>>, vector<16x1xf32>
    %53 = vector.broadcast %52 : vector<16x1xf32> to vector<16x128xf32>
    %54 = arith.addf %51, %53 : vector<16x128xf32>
    %55 = vector.extract_strided_slice %54 {offsets = [0, 0], sizes = [8, 128], strides = [1, 1]} : vector<16x128xf32> to vector<8x128xf32>
    %56 = vector.extract_strided_slice %54 {offsets = [8, 0], sizes = [8, 128], strides = [1, 1]} : vector<16x128xf32> to vector<8x128xf32>
    %cst_48 = arith.constant 0.000000e+00 : f32
    %57 = vector.broadcast %cst_48 : f32 to vector<8x128xf32>
    %58 = arith.subf %57, %56 : vector<8x128xf32>
    %59 = math.exp %58 : vector<8x128xf32>
    %60 = arith.subf %3, %55 : vector<8x128xf32>
    %61 = arith.mulf %60, %59 : vector<8x128xf32>
    %cst_49 = arith.constant -5.000000e-01 : f32
    %62 = vector.broadcast %cst_49 : f32 to vector<8x128xf32>
    %63 = arith.mulf %62, %61 : vector<8x128xf32>
    %64 = arith.mulf %63, %61 : vector<8x128xf32>
    %65 = arith.subf %64, %56 : vector<8x128xf32>
    %cst_50 = arith.constant 0.918938517 : f32
    %66 = vector.broadcast %cst_50 : f32 to vector<8x128xf32>
    %67 = arith.subf %65, %66 : vector<8x128xf32>
    %68 = arith.subf %67, %3 : vector<8x128xf32>
    %cst_51 = arith.constant 0.707106769 : f32
    %69 = vector.broadcast %cst_51 : f32 to vector<8x128xf32>
    %70 = arith.mulf %61, %69 : vector<8x128xf32>
    %71 = math.erf %70 : vector<8x128xf32>
    %cst_52 = arith.constant 1.000000e+00 : f32
    %72 = vector.broadcast %cst_52 : f32 to vector<8x128xf32>
    %73 = arith.addf %72, %71 : vector<8x128xf32>
    %cst_53 = arith.constant 5.000000e-01 : f32
    %74 = vector.broadcast %cst_53 : f32 to vector<8x128xf32>
    %75 = arith.mulf %74, %73 : vector<8x128xf32>
    %76 = arith.mulf %68, %5 : vector<8x128xf32>
    %cst_54 = arith.constant dense<0.000000e+00> : vector<128xf32>
    %77 = vector.multi_reduction <add>, %5, %cst_54 [0] : vector<8x128xf32> to vector<128xf32>
    %78 = vector.shape_cast %77 : vector<128xf32> to vector<1x128xf32>
    %cst_55 = arith.constant 1.000000e+00 : f32
    %79 = vector.broadcast %cst_55 : f32 to vector<1x128xf32>
    %80 = arith.subf %78, %79 : vector<1x128xf32>
    %81 = arith.fptosi %80 : vector<1x128xf32> to vector<1x128xi32>
    %82 = tpu.iota {dimensions = array<i32: 0>} : vector<8x128xi32>
    %83 = vector.broadcast %81 : vector<1x128xi32> to vector<8x128xi32>
    %84 = arith.cmpi eq, %82, %83 : vector<8x128xi32>
    %85 = arith.extui %84 : vector<8x128xi1> to vector<8x128xi32>
    %86 = arith.sitofp %85 : vector<8x128xi32> to vector<8x128xf32>
    %cst_56 = arith.constant dense<0.000000e+00> : vector<128xf32>
    %87 = vector.multi_reduction <add>, %76, %cst_56 [0] : vector<8x128xf32> to vector<128xf32>
    %88 = vector.shape_cast %87 : vector<128xf32> to vector<1x128xf32>
    %89 = arith.mulf %86, %76 : vector<8x128xf32>
    %cst_57 = arith.constant dense<0.000000e+00> : vector<128xf32>
    %90 = vector.multi_reduction <add>, %89, %cst_57 [0] : vector<8x128xf32> to vector<128xf32>
    %91 = vector.shape_cast %90 : vector<128xf32> to vector<1x128xf32>
    %92 = arith.subf %88, %91 : vector<1x128xf32>
    %93 = arith.mulf %86, %75 : vector<8x128xf32>
    %cst_58 = arith.constant dense<0.000000e+00> : vector<128xf32>
    %94 = vector.multi_reduction <add>, %93, %cst_58 [0] : vector<8x128xf32> to vector<128xf32>
    %95 = vector.shape_cast %94 : vector<128xf32> to vector<1x128xf32>
    %cst_59 = arith.constant 1.000000e+00 : f32
    %96 = vector.broadcast %cst_59 : f32 to vector<1x128xf32>
    %97 = arith.subf %96, %95 : vector<1x128xf32>
    %98 = math.log %97 : vector<1x128xf32>
    %99 = arith.addf %92, %98 : vector<1x128xf32>
    %c0_60 = arith.constant 0 : index
    %c0_61 = arith.constant 0 : index
    %100 = vector.load %arg6[%c0_60, %c0_61] : memref<1x128xf32, #tpu.memory_space<vmem>>, vector<1x128xf32>
    tpu.vector_store %arg6[%c0_60, %c0_61], %99 {strides = array<i32>} : memref<1x128xf32, #tpu.memory_space<vmem>>, vector<1x128xf32>,
    return
  }
  func.func @transform_0(%arg0: i32) -> (i32, i32) {
    %c0_i32 = arith.constant 0 : i32
    %c0_i32_0 = arith.constant 0 : i32
    return %c0_i32, %arg0 : i32, i32
  }
  func.func @transform_1(%arg0: i32) -> (i32, i32) {
    %c0_i32 = arith.constant 0 : i32
    %c0_i32_0 = arith.constant 0 : i32
    return %c0_i32, %arg0 : i32, i32
  }
  func.func @transform_2(%arg0: i32) -> (i32, i32) {
    %c0_i32 = arith.constant 0 : i32
    %c0_i32_0 = arith.constant 0 : i32
    %c0_i32_1 = arith.constant 0 : i32
    return %c0_i32, %c0_i32_0 : i32, i32
  }
  func.func @transform_3(%arg0: i32) -> (i32, i32) {
    %c0_i32 = arith.constant 0 : i32
    %c0_i32_0 = arith.constant 0 : i32
    %c0_i32_1 = arith.constant 0 : i32
    return %c0_i32, %c0_i32_0 : i32, i32
  }
  func.func @transform_4(%arg0: i32) -> (i32, i32) {
    %c0_i32 = arith.constant 0 : i32
    %c0_i32_0 = arith.constant 0 : i32
    %c0_i32_1 = arith.constant 0 : i32
    return %c0_i32, %c0_i32_0 : i32, i32
  }
  func.func @transform_5(%arg0: i32) -> (i32, i32) {
    %c0_i32 = arith.constant 0 : i32
    %c0_i32_0 = arith.constant 0 : i32
    return %c0_i32, %arg0 : i32, i32
  }
}

</mosaic_0001>

<llo_original>
// kernel: tpu_custom_call.1
$region0: #{tpu_custom_call.1}
  #allocation0 [shape = 'u32[]', space=smem, size = 0x4, offset = 0x4, fixed_abs, tag = 'smem constant byte address 0x4 - core index']
  #allocation1 [shape = 'u32[72,128]{1,0:T(1,128)}', space=vmem, size = 0x9000, scoped, tag = 'internal scratch']
  #allocation2 [shape = 'f32[128,128]{1,0:T(8,128)}', space=vmem, size = 0x10000, scoped, tag = 'scratch operand']
  #allocation3 [shape = 'f32[128,128]{1,0:T(8,128)}', space=vmem, size = 0x10000, scoped, tag = 'scratch operand']
  %s0 = inlined_call_operand.vmem [shape: f32[8,128], index: 0, kind: input, shape index: {}]
  %s1 = inlined_call_operand.vmem [shape: s8[8,128], index: 1, kind: input, shape index: {}]
  %s2 = inlined_call_operand.vmem [shape: f32[16,16], index: 2, kind: input, shape index: {}]
  %s3 = inlined_call_operand.vmem [shape: f32[128,17], index: 3, kind: input, shape index: {}]
  %s4 = inlined_call_operand.vmem [shape: f32[16,129], index: 4, kind: input, shape index: {}]
  %s5 = inlined_call_operand.hbm [shape: f32[1,128], index: 5, kind: output, shape index: {}]
  %s6 = sld [smem:[#allocation0]]
  $region30: #{tpu_custom_call.1} parent=0
    _
  %s8 = ssub.s32 1, %s6
  %s9 = scalar_select 0, %s8, %s6
  $region1: #{tpu_custom_call.1} parent=0
    #allocation4 [shape = 'u8[512]{0}', space=vmem, size = 0x400, scoped, tag = 'output window, operand 0, single buffered']
    #allocation5 [shape = 's32[1]{0}', space=sflag, size = 0x4, scoped, tag = 'scoped memory for tpu_custom_call.1']
    %10 = vsyncpa [#allocation5], 0
    // Predicated region
    $region2: #{tpu_custom_call.1} parent=1 // pred_check
      _
    $region3: #{tpu_custom_call.1} parent=1 // pred_check_branch
      %12 = sbr.rel (0) target = $region5
    $region4: #{tpu_custom_call.1} parent=1 // pred_region
      _
    $region5: #{tpu_custom_call.1} parent=1 // pred_fallthru
      _
    // Predicated region
    $region6: #{tpu_custom_call.1} parent=1 // pred_check
      _
    $region7: #{tpu_custom_call.1} parent=1 // pred_check_branch
      %14 = sbr.rel (0) target = $region9
    $region8: #{tpu_custom_call.1} parent=1 // pred_region
      _
    $region9: #{tpu_custom_call.1} parent=1 // pred_fallthru
      _
    // Predicated region
    $region10: #{tpu_custom_call.1} parent=1 // pred_check
      _
    $region11: #{tpu_custom_call.1} parent=1 // pred_check_branch
      %16 = sbr.rel (0) target = $region13
    $region12: #{tpu_custom_call.1} parent=1 // pred_region
      _
    $region13: #{tpu_custom_call.1} parent=1 // pred_fallthru
      _
    // Predicated region
    $region14: #{tpu_custom_call.1} parent=1 // pred_check
      _
    $region15: #{tpu_custom_call.1} parent=1 // pred_check_branch
      %18 = sbr.rel (0) target = $region17
    $region16: #{tpu_custom_call.1} parent=1 // pred_region
      _
    $region17: #{tpu_custom_call.1} parent=1 // pred_fallthru
      _
    // Predicated region
    $region18: #{tpu_custom_call.1} parent=1 // pred_check
      _
    $region19: #{tpu_custom_call.1} parent=1 // pred_check_branch
      %20 = sbr.rel (0) target = $region21
    $region20: #{tpu_custom_call.1} parent=1 // pred_region
      _
    $region21: #{tpu_custom_call.1} parent=1 // pred_fallthru
      _
    %v21 = vld [vmem:[%s0] sm:$0xff]
    %v22 = vmax.f32 %v21, 1e-08
    %v23 = vlog2.pop %v22
    %v24 = vmul.f32 %v23, 0.6931472
    %v25 = vld [vmem:[%s1] sm:$0x3]
    %v26 = vunpack.c.0.s8 %v25
    %v27 = vcvt.s32.f32 %v26
    %v28 = vld [vmem:[%s3] sm:$0xff]
    %v29 = vld [vmem:[%s3 + $0x8] sm:$0xff]
    %v30 = vld [vmem:[%s3 + $0x10] sm:$0xff]
    %v31 = vld [vmem:[%s3 + $0x18] sm:$0xff]
    %v32 = vld [vmem:[%s3 + $0x20] sm:$0xff]
    %v33 = vld [vmem:[%s3 + $0x28] sm:$0xff]
    %v34 = vld [vmem:[%s3 + $0x30] sm:$0xff]
    %v35 = vld [vmem:[%s3 + $0x38] sm:$0xff]
    %v36 = vld [vmem:[%s3 + $0x40] sm:$0xff]
    %v37 = vld [vmem:[%s3 + $0x48] sm:$0xff]
    %v38 = vld [vmem:[%s3 + $0x50] sm:$0xff]
    %v39 = vld [vmem:[%s3 + $0x58] sm:$0xff]
    %v40 = vld [vmem:[%s3 + $0x60] sm:$0xff]
    %v41 = vld [vmem:[%s3 + $0x68] sm:$0xff]
    %v42 = vld [vmem:[%s3 + $0x70] sm:$0xff]
    %v43 = vld [vmem:[%s3 + $0x78] sm:$0xff]
    %45 = vset.pattern.permute.xlu0 16
    %46 = vperm.xlu0 %45, %v28
    %v47 = vpop.permute.xlu0 %46
    %50 = vset.pattern.permute.xlu0 16
    %51 = vperm.xlu0 %50, %v29
    %v52 = vpop.permute.xlu0 %51
    %55 = vset.pattern.permute.xlu0 16
    %56 = vperm.xlu0 %55, %v30
    %v57 = vpop.permute.xlu0 %56
    %60 = vset.pattern.permute.xlu0 16
    %61 = vperm.xlu0 %60, %v31
    %v62 = vpop.permute.xlu0 %61
    %65 = vset.pattern.permute.xlu0 16
    %66 = vperm.xlu0 %65, %v32
    %v67 = vpop.permute.xlu0 %66
    %70 = vset.pattern.permute.xlu0 16
    %71 = vperm.xlu0 %70, %v33
    %v72 = vpop.permute.xlu0 %71
    %75 = vset.pattern.permute.xlu0 16
    %76 = vperm.xlu0 %75, %v34
    %v77 = vpop.permute.xlu0 %76
    %80 = vset.pattern.permute.xlu0 16
    %81 = vperm.xlu0 %80, %v35
    %v82 = vpop.permute.xlu0 %81
    %85 = vset.pattern.permute.xlu0 16
    %86 = vperm.xlu0 %85, %v36
    %v87 = vpop.permute.xlu0 %86
    %90 = vset.pattern.permute.xlu0 16
    %91 = vperm.xlu0 %90, %v37
    %v92 = vpop.permute.xlu0 %91
    %95 = vset.pattern.permute.xlu0 16
    %96 = vperm.xlu0 %95, %v38
    %v97 = vpop.permute.xlu0 %96
    %100 = vset.pattern.permute.xlu0 16
    %101 = vperm.xlu0 %100, %v39
    %v102 = vpop.permute.xlu0 %101
    %105 = vset.pattern.permute.xlu0 16
    %106 = vperm.xlu0 %105, %v40
    %v107 = vpop.permute.xlu0 %106
    %110 = vset.pattern.permute.xlu0 16
    %111 = vperm.xlu0 %110, %v41
    %v112 = vpop.permute.xlu0 %111
    %115 = vset.pattern.permute.xlu0 16
    %116 = vperm.xlu0 %115, %v42
    %v117 = vpop.permute.xlu0 %116
    %120 = vset.pattern.permute.xlu0 16
    %121 = vperm.xlu0 %120, %v43
    %v122 = vpop.permute.xlu0 %121
    %vm124 = vcmask 130048
    %v125 = vsel %vm124, %v28, 0
    %v127 = vsel %vm124, %v29, 0
    %v129 = vsel %vm124, %v30, 0
    %v131 = vsel %vm124, %v31, 0
    %v133 = vsel %vm124, %v32, 0
    %v135 = vsel %vm124, %v33, 0
    %v137 = vsel %vm124, %v34, 0
    %v139 = vsel %vm124, %v35, 0
    %v141 = vsel %vm124, %v36, 0
    %v143 = vsel %vm124, %v37, 0
    %v145 = vsel %vm124, %v38, 0
    %v147 = vsel %vm124, %v39, 0
    %v149 = vsel %vm124, %v40, 0
    %v151 = vsel %vm124, %v41, 0
    %v153 = vsel %vm124, %v42, 0
    %v155 = vsel %vm124, %v43, 0
    %157 = vmatpush.msra.mxu0 0.0
    %158 = vmatpush.msra.mxu0 0.0
    %159 = vmatpush.msra.mxu0 0.0
    %160 = vmatpush.msra.mxu0 0.0
    %161 = vmatpush.msra.mxu0 0.0
    %162 = vmatpush.msra.mxu0 0.0
    %163 = vmatpush.msra.mxu0 0.0
    %164 = vmatpush.msra.mxu0 0.0
    %165 = vmatpush.msra.mxu0 0.0
    %166 = vmatpush.msra.mxu0 0.0
    %167 = vmatpush.msra.mxu0 0.0
    %168 = vmatpush.msra.mxu0 0.0
    %169 = vmatpush.msra.mxu0 0.0
    %170 = vmatpush.msra.mxu0 0.0
    %171 = vmatpush.msra.mxu0 %v24
    %172 = vmatpush.msra.mxu0 %v22
    %173 = vmatmul.f32.gmra.mxu0 %v125
    %v174 = vpop.f32.mrf.mxu0
    %v175 = vadd.f32 %v47, %v174
    %176 = vmatmul.f32.gmra.mxu0 %v127
    %v177 = vpop.f32.mrf.mxu0
    %v178 = vadd.f32 %v52, %v177
    %179 = vmatmul.f32.gmra.mxu0 %v129
    %v180 = vpop.f32.mrf.mxu0
    %v181 = vadd.f32 %v57, %v180
    %182 = vmatmul.f32.gmra.mxu0 %v131
    %v183 = vpop.f32.mrf.mxu0
    %v184 = vadd.f32 %v62, %v183
    %185 = vmatmul.f32.gmra.mxu0 %v133
    %v186 = vpop.f32.mrf.mxu0
    %v187 = vadd.f32 %v67, %v186
    %188 = vmatmul.f32.gmra.mxu0 %v135
    %v189 = vpop.f32.mrf.mxu0
    %v190 = vadd.f32 %v72, %v189
    %191 = vmatmul.f32.gmra.mxu0 %v137
    %v192 = vpop.f32.mrf.mxu0
    %v193 = vadd.f32 %v77, %v192
    %194 = vmatmul.f32.gmra.mxu0 %v139
    %v195 = vpop.f32.mrf.mxu0
    %v196 = vadd.f32 %v82, %v195
    %197 = vmatmul.f32.gmra.mxu0 %v141
    %v198 = vpop.f32.mrf.mxu0
    %v199 = vadd.f32 %v87, %v198
    %200 = vmatmul.f32.gmra.mxu0 %v143
    %v201 = vpop.f32.mrf.mxu0
    %v202 = vadd.f32 %v92, %v201
    %203 = vmatmul.f32.gmra.mxu0 %v145
    %v204 = vpop.f32.mrf.mxu0
    %v205 = vadd.f32 %v97, %v204
    %206 = vmatmul.f32.gmra.mxu0 %v147
    %v207 = vpop.f32.mrf.mxu0
    %v208 = vadd.f32 %v102, %v207
    %209 = vmatmul.f32.gmra.mxu0 %v149
    %v210 = vpop.f32.mrf.mxu0
    %v211 = vadd.f32 %v107, %v210
    %212 = vmatmul.f32.gmra.mxu0 %v151
    %v213 = vpop.f32.mrf.mxu0
    %v214 = vadd.f32 %v112, %v213
    %215 = vmatmul.f32.gmra.mxu0 %v153
    %v216 = vpop.f32.mrf.mxu0
    %v217 = vadd.f32 %v117, %v216
    %218 = vmatmul.f32.gmra.mxu0 %v155
    %v219 = vpop.f32.mrf.mxu0
    %v220 = vadd.f32 %v122, %v219
    %221 = vdwg.mxu0
    %222 = vst [vmem:[#allocation2] sm:$0xff] %v175
    %223 = vst [vmem:[#allocation2 + $0x8] sm:$0xff] %v178
    %224 = vst [vmem:[#allocation2 + $0x10] sm:$0xff] %v181
    %225 = vst [vmem:[#allocation2 + $0x18] sm:$0xff] %v184
    %226 = vst [vmem:[#allocation2 + $0x20] sm:$0xff] %v187
    %227 = vst [vmem:[#allocation2 + $0x28] sm:$0xff] %v190
    %228 = vst [vmem:[#allocation2 + $0x30] sm:$0xff] %v193
    %229 = vst [vmem:[#allocation2 + $0x38] sm:$0xff] %v196
    %230 = vst [vmem:[#allocation2 + $0x40] sm:$0xff] %v199
    %231 = vst [vmem:[#allocation2 + $0x48] sm:$0xff] %v202
    %232 = vst [vmem:[#allocation2 + $0x50] sm:$0xff] %v205
    %233 = vst [vmem:[#allocation2 + $0x58] sm:$0xff] %v208
    %234 = vst [vmem:[#allocation2 + $0x60] sm:$0xff] %v211
    %235 = vst [vmem:[#allocation2 + $0x68] sm:$0xff] %v214
    %236 = vst [vmem:[#allocation2 + $0x70] sm:$0xff] %v217
    %237 = vst [vmem:[#allocation2 + $0x78] sm:$0xff] %v220
    %v238 = vld [vmem:[%s2] sm:$0xff]
    %v239 = vld [vmem:[%s2 + $0x8] sm:$0xff]
    %240 = vst [vmem:[#allocation3] sm:$0xff] 0.0
    %241 = vst [vmem:[#allocation3 + $0x8] sm:$0xff] 0.0
    %v242 = vld [vmem:[#allocation2] sm:$0xff]
    %v243 = vld [vmem:[#allocation2 + $0x8] sm:$0xff]
    %v244 = vtanh.pop %v242
    %v245 = vtanh.pop %v243
    %246 = vst [vmem:[#allocation3 + $0x10] sm:$0xff] %v244
    %247 = vst [vmem:[#allocation3 + $0x18] sm:$0xff] %v245
    %v248 = vld [vmem:[#allocation2 + $0x10] sm:$0xff]
    %v249 = vld [vmem:[#allocation2 + $0x18] sm:$0xff]
    %v251 = vsel %vm124, %v238, 0
    %v254 = vsel %vm124, %v239, 0
    %256 = vmatpush.msra.mxu0 0.0
    %257 = vmatpush.msra.mxu0 0.0
    %258 = vmatpush.msra.mxu0 0.0
    %259 = vmatpush.msra.mxu0 0.0
    %260 = vmatpush.msra.mxu0 0.0
    %261 = vmatpush.msra.mxu0 0.0
    %262 = vmatpush.msra.mxu0 0.0
    %263 = vmatpush.msra.mxu0 0.0
    %264 = vmatpush.msra.mxu0 0.0
    %265 = vmatpush.msra.mxu0 0.0
    %266 = vmatpush.msra.mxu0 0.0
    %267 = vmatpush.msra.mxu0 0.0
    %268 = vmatpush.msra.mxu0 0.0
    %269 = vmatpush.msra.mxu0 0.0
    %270 = vmatpush.msra.mxu0 %v245
    %271 = vmatpush.msra.mxu0 %v244
    %272 = vmatmul.f32.gmra.mxu0 %v251
    %v273 = vpop.f32.mrf.mxu0
    %v274 = vadd.f32 0.0, %v273
    %275 = vmatmul.f32.gmra.mxu0 %v254
    %v276 = vpop.f32.mrf.mxu0
    %v277 = vadd.f32 0.0, %v276
    %278 = vdwg.mxu0
    %v279 = vadd.f32 %v248, %v274
    %v280 = vadd.f32 %v249, %v277
    %v281 = vtanh.pop %v279
    %v282 = vtanh.pop %v280
    %283 = vst [vmem:[#allocation3 + $0x20] sm:$0xff] %v281
    %284 = vst [vmem:[#allocation3 + $0x28] sm:$0xff] %v282
    %v285 = vld [vmem:[#allocation2 + $0x20] sm:$0xff]
    %v286 = vld [vmem:[#allocation2 + $0x28] sm:$0xff]
    %287 = vmatpush.msra.mxu0 0.0
    %288 = vmatpush.msra.mxu0 0.0
    %289 = vmatpush.msra.mxu0 0.0
    %290 = vmatpush.msra.mxu0 0.0
    %291 = vmatpush.msra.mxu0 0.0
    %292 = vmatpush.msra.mxu0 0.0
    %293 = vmatpush.msra.mxu0 0.0
    %294 = vmatpush.msra.mxu0 0.0
    %295 = vmatpush.msra.mxu0 0.0
    %296 = vmatpush.msra.mxu0 0.0
    %297 = vmatpush.msra.mxu0 0.0
    %298 = vmatpush.msra.mxu0 0.0
    %299 = vmatpush.msra.mxu0 0.0
    %300 = vmatpush.msra.mxu0 0.0
    %301 = vmatpush.msra.mxu0 %v282
    %302 = vmatpush.msra.mxu0 %v281
    %303 = vmatmul.f32.gmra.mxu0 %v251
    %v304 = vpop.f32.mrf.mxu0
    %v305 = vadd.f32 0.0, %v304
    %306 = vmatmul.f32.gmra.mxu0 %v254
    %v307 = vpop.f32.mrf.mxu0
    %v308 = vadd.f32 0.0, %v307
    %309 = vdwg.mxu0
    %v310 = vadd.f32 %v285, %v305
    %v311 = vadd.f32 %v286, %v308
    %v312 = vtanh.pop %v310
    %v313 = vtanh.pop %v311
    %314 = vst [vmem:[#allocation3 + $0x30] sm:$0xff] %v312
    %315 = vst [vmem:[#allocation3 + $0x38] sm:$0xff] %v313
    %v316 = vld [vmem:[#allocation2 + $0x30] sm:$0xff]
    %v317 = vld [vmem:[#allocation2 + $0x38] sm:$0xff]
    %318 = vmatpush.msra.mxu0 0.0
    %319 = vmatpush.msra.mxu0 0.0
    %320 = vmatpush.msra.mxu0 0.0
    %321 = vmatpush.msra.mxu0 0.0
    %322 = vmatpush.msra.mxu0 0.0
    %323 = vmatpush.msra.mxu0 0.0
    %324 = vmatpush.msra.mxu0 0.0
    %325 = vmatpush.msra.mxu0 0.0
    %326 = vmatpush.msra.mxu0 0.0
    %327 = vmatpush.msra.mxu0 0.0
    %328 = vmatpush.msra.mxu0 0.0
    %329 = vmatpush.msra.mxu0 0.0
    %330 = vmatpush.msra.mxu0 0.0
    %331 = vmatpush.msra.mxu0 0.0
    %332 = vmatpush.msra.mxu0 %v313
    %333 = vmatpush.msra.mxu0 %v312
    %334 = vmatmul.f32.gmra.mxu0 %v251
    %v335 = vpop.f32.mrf.mxu0
    %v336 = vadd.f32 0.0, %v335
    %337 = vmatmul.f32.gmra.mxu0 %v254
    %v338 = vpop.f32.mrf.mxu0
    %v339 = vadd.f32 0.0, %v338
    %340 = vdwg.mxu0
    %v341 = vadd.f32 %v316, %v336
    %v342 = vadd.f32 %v317, %v339
    %v343 = vtanh.pop %v341
    %v344 = vtanh.pop %v342
    %345 = vst [vmem:[#allocation3 + $0x40] sm:$0xff] %v343
    %346 = vst [vmem:[#allocation3 + $0x48] sm:$0xff] %v344
    %v347 = vld [vmem:[#allocation2 + $0x40] sm:$0xff]
    %v348 = vld [vmem:[#allocation2 + $0x48] sm:$0xff]
    %349 = vmatpush.msra.mxu0 0.0
    %350 = vmatpush.msra.mxu0 0.0
    %351 = vmatpush.msra.mxu0 0.0
    %352 = vmatpush.msra.mxu0 0.0
    %353 = vmatpush.msra.mxu0 0.0
    %354 = vmatpush.msra.mxu0 0.0
    %355 = vmatpush.msra.mxu0 0.0
    %356 = vmatpush.msra.mxu0 0.0
    %357 = vmatpush.msra.mxu0 0.0
    %358 = vmatpush.msra.mxu0 0.0
    %359 = vmatpush.msra.mxu0 0.0
    %360 = vmatpush.msra.mxu0 0.0
    %361 = vmatpush.msra.mxu0 0.0
    %362 = vmatpush.msra.mxu0 0.0
    %363 = vmatpush.msra.mxu0 %v344
    %364 = vmatpush.msra.mxu0 %v343
    %365 = vmatmul.f32.gmra.mxu0 %v251
    %v366 = vpop.f32.mrf.mxu0
    %v367 = vadd.f32 0.0, %v366
    %368 = vmatmul.f32.gmra.mxu0 %v254
    %v369 = vpop.f32.mrf.mxu0
    %v370 = vadd.f32 0.0, %v369
    %371 = vdwg.mxu0
    %v372 = vadd.f32 %v347, %v367
    %v373 = vadd.f32 %v348, %v370
    %v374 = vtanh.pop %v372
    %v375 = vtanh.pop %v373
    %376 = vst [vmem:[#allocation3 + $0x50] sm:$0xff] %v374
    %377 = vst [vmem:[#allocation3 + $0x58] sm:$0xff] %v375
    %v378 = vld [vmem:[#allocation2 + $0x50] sm:$0xff]
    %v379 = vld [vmem:[#allocation2 + $0x58] sm:$0xff]
    %380 = vmatpush.msra.mxu0 0.0
    %381 = vmatpush.msra.mxu0 0.0
    %382 = vmatpush.msra.mxu0 0.0
    %383 = vmatpush.msra.mxu0 0.0
    %384 = vmatpush.msra.mxu0 0.0
    %385 = vmatpush.msra.mxu0 0.0
    %386 = vmatpush.msra.mxu0 0.0
    %387 = vmatpush.msra.mxu0 0.0
    %388 = vmatpush.msra.mxu0 0.0
    %389 = vmatpush.msra.mxu0 0.0
    %390 = vmatpush.msra.mxu0 0.0
    %391 = vmatpush.msra.mxu0 0.0
    %392 = vmatpush.msra.mxu0 0.0
    %393 = vmatpush.msra.mxu0 0.0
    %394 = vmatpush.msra.mxu0 %v375
    %395 = vmatpush.msra.mxu0 %v374
    %396 = vmatmul.f32.gmra.mxu0 %v251
    %v397 = vpop.f32.mrf.mxu0
    %v398 = vadd.f32 0.0, %v397
    %399 = vmatmul.f32.gmra.mxu0 %v254
    %v400 = vpop.f32.mrf.mxu0
    %v401 = vadd.f32 0.0, %v400
    %402 = vdwg.mxu0
    %v403 = vadd.f32 %v378, %v398
    %v404 = vadd.f32 %v379, %v401
    %v405 = vtanh.pop %v403
    %v406 = vtanh.pop %v404
    %407 = vst [vmem:[#allocation3 + $0x60] sm:$0xff] %v405
    %408 = vst [vmem:[#allocation3 + $0x68] sm:$0xff] %v406
    %v409 = vld [vmem:[#allocation2 + $0x60] sm:$0xff]
    %v410 = vld [vmem:[#allocation2 + $0x68] sm:$0xff]
    %411 = vmatpush.msra.mxu0 0.0
    %412 = vmatpush.msra.mxu0 0.0
    %413 = vmatpush.msra.mxu0 0.0
    %414 = vmatpush.msra.mxu0 0.0
    %415 = vmatpush.msra.mxu0 0.0
    %416 = vmatpush.msra.mxu0 0.0
    %417 = vmatpush.msra.mxu0 0.0
    %418 = vmatpush.msra.mxu0 0.0
    %419 = vmatpush.msra.mxu0 0.0
    %420 = vmatpush.msra.mxu0 0.0
    %421 = vmatpush.msra.mxu0 0.0
    %422 = vmatpush.msra.mxu0 0.0
    %423 = vmatpush.msra.mxu0 0.0
    %424 = vmatpush.msra.mxu0 0.0
    %425 = vmatpush.msra.mxu0 %v406
    %426 = vmatpush.msra.mxu0 %v405
    %427 = vmatmul.f32.gmra.mxu0 %v251
    %v428 = vpop.f32.mrf.mxu0
    %v429 = vadd.f32 0.0, %v428
    %430 = vmatmul.f32.gmra.mxu0 %v254
    %v431 = vpop.f32.mrf.mxu0
    %v432 = vadd.f32 0.0, %v431
    %433 = vdwg.mxu0
    %v434 = vadd.f32 %v409, %v429
    %v435 = vadd.f32 %v410, %v432
    %v436 = vtanh.pop %v434
    %v437 = vtanh.pop %v435
    %438 = vst [vmem:[#allocation3 + $0x70] sm:$0xff] %v436
    %439 = vst [vmem:[#allocation3 + $0x78] sm:$0xff] %v437
    %v440 = vld [vmem:[#allocation3] sm:$0xff]
    %v441 = vld [vmem:[#allocation3 + $0x8] sm:$0xff]
    %v442 = vld [vmem:[#allocation3 + $0x10] sm:$0xff]
    %v443 = vld [vmem:[#allocation3 + $0x18] sm:$0xff]
    %v444 = vld [vmem:[#allocation3 + $0x20] sm:$0xff]
    %v445 = vld [vmem:[#allocation3 + $0x28] sm:$0xff]
    %v446 = vld [vmem:[#allocation3 + $0x30] sm:$0xff]
    %v447 = vld [vmem:[#allocation3 + $0x38] sm:$0xff]
    %v448 = vld [vmem:[#allocation3 + $0x40] sm:$0xff]
    %v449 = vld [vmem:[#allocation3 + $0x48] sm:$0xff]
    %v450 = vld [vmem:[#allocation3 + $0x50] sm:$0xff]
    %v451 = vld [vmem:[#allocation3 + $0x58] sm:$0xff]
    %v452 = vld [vmem:[#allocation3 + $0x60] sm:$0xff]
    %v453 = vld [vmem:[#allocation3 + $0x68] sm:$0xff]
    %v454 = vld [vmem:[#allocation3 + $0x70] sm:$0xff]
    %v455 = vld [vmem:[#allocation3 + $0x78] sm:$0xff]
    %v456 = vld [vmem:[%s4] sm:$0xff]
    %v457 = vld [vmem:[%s4 + $0x10] sm:$0xff]
    %v458 = vld [vmem:[%s4 + $0x8] sm:$0xff]
    %v459 = vld [vmem:[%s4 + $0x18] sm:$0xff]
    %461 = vset.pattern.permute.xlu0 0
    %462 = vperm.xlu0 %461, %v458
    %v463 = vpop.permute.xlu0 %462
    %466 = vset.pattern.permute.xlu0 0
    %467 = vperm.xlu0 %466, %v459
    %v468 = vpop.permute.xlu0 %467
    %470 = vmatpush.msra.mxu0 %v455
    %471 = vmatpush.msra.mxu0 %v454
    %472 = vmatpush.msra.mxu0 %v453
    %473 = vmatpush.msra.mxu0 %v452
    %474 = vmatpush.msra.mxu0 %v451
    %475 = vmatpush.msra.mxu0 %v450
    %476 = vmatpush.msra.mxu0 %v449
    %477 = vmatpush.msra.mxu0 %v448
    %478 = vmatpush.msra.mxu0 %v447
    %479 = vmatpush.msra.mxu0 %v446
    %480 = vmatpush.msra.mxu0 %v445
    %481 = vmatpush.msra.mxu0 %v444
    %482 = vmatpush.msra.mxu0 %v443
    %483 = vmatpush.msra.mxu0 %v442
    %484 = vmatpush.msra.mxu0 %v441
    %485 = vmatpush.msra.mxu0 %v440
    %486 = vmatmul.f32.gmra.mxu0 %v456
    %v487 = vpop.f32.mrf.mxu0
    %v488 = vadd.f32 %v463, %v487
    %489 = vmatmul.f32.gmra.mxu0 %v457
    %v490 = vpop.f32.mrf.mxu0
    %v491 = vadd.f32 %v468, %v490
    %492 = vdwg.mxu0
    %v493 = vsub.f32 0.0, %v491
    %v494 = vmul.f32 %v493, 1.442695
    %v495 = vpow.pop %v494
    %v496 = vsub.f32 %v24, %v488
    %v497 = vmul.f32 %v496, %v495
    %v498 = vmul.f32 %v497, -0.5
    %v499 = vmul.f32 %v498, %v497
    %v500 = vsub.f32 %v499, %v491
    %v501 = vsub.f32 %v500, 0.9189385
    %v502 = vsub.f32 %v501, %v24
    %v503 = vmul.f32 %v497, 0.70710677
    %v504 = vmul.f32 %v503, %v503
    %v505 = vmin.f32 16.0, %v504
    %v506 = vmul.f32 %v505, 2.1237322e-06
    %v507 = vadd.f32 %v506, 0.00028619796
    %v508 = vmul.f32 %v505, %v507
    %v509 = vadd.f32 %v508, 0.0036580483
    %v510 = vmul.f32 %v505, %v509
    %v511 = vadd.f32 %v510, 0.05243302
    %v512 = vmul.f32 %v505, %v511
    %v513 = vadd.f32 %v512, 0.18741608
    %v514 = vmul.f32 %v505, %v513
    %v515 = vadd.f32 %v514, 1.1283791
    %v516 = vmul.f32 %v503, %v515
    %v517 = vmul.f32 %v505, 3.8918573e-05
    %v518 = vadd.f32 %v517, 0.001143296
    %v519 = vmul.f32 %v505, %v518
    %v520 = vadd.f32 %v519, 0.014752088
    %v521 = vmul.f32 %v505, %v520
    %v522 = vadd.f32 %v521, 0.112945676
    %v523 = vmul.f32 %v505, %v522
    %v524 = vadd.f32 %v523, 0.4994258
    %v525 = vmul.f32 %v505, %v524
    %v526 = vadd.f32 %v525, 1.0
    %v527 = vrcp.pop %v526
    %v528 = vmul.f32 %v526, %v527
    %v529 = vsub.f32 1.0, %v528
    %v530 = vmul.f32 %v527, %v529
    %v531 = vadd.f32 %v527, %v530
    %vm532 = vweird.f32 %v526
    %vm533 = vweird.f32 %v527
    %vm534 = vmor %vm532, %vm533
    %v535 = vsel %vm534, %v527, %v531
    %v536 = vand.u32 2147483647, %v526
    %vm537 = vcmp.eq.f32.partialorder %v536, 8.507059e+37
    %v538 = vand.u32 %v526, 2147483648
    %v539 = vor.u32 1.1754944e-38, %v538
    %v540 = vsel %vm537, %v539, %v535
    %v541 = vmul.f32 %v516, %v540
    %v542 = vmin.f32 %v541, 1.0
    %v543 = vmax.f32 %v542, -1.0
    %v544 = vadd.f32 %v543, 1.0
    %v545 = vmul.f32 %v544, 0.5
    %v546 = vmul.f32 %v502, %v27
    %v547 = vrot.slane %v27, 4
    %v548 = vadd.f32 %v27, %v547
    %v549 = vrot.slane %v548, 2
    %v550 = vadd.f32 %v548, %v549
    %v551 = vrot.slane %v550, 1
    %v552 = vadd.f32 %v550, %v551
    %v553 = vsub.f32 %v552, 1.0
    %v554 = vcvt.f32.s32.to.zero.pseudo %v553
    %v555 = vlaneseq
    %v556 = vshrl.u32 %v555, 7
    %vm557 = vcmp.eq.s32.totalorder %v556, %v554
    %v558 = vsel %vm557, 1, 0
    %v559 = vcvt.s32.f32 %v558
    %v560 = vrot.slane %v546, 4
    %v561 = vadd.f32 %v546, %v560
    %v562 = vrot.slane %v561, 2
    %v563 = vadd.f32 %v561, %v562
    %v564 = vrot.slane %v563, 1
    %v565 = vadd.f32 %v563, %v564
    %v566 = vmul.f32 %v559, %v546
    %v567 = vrot.slane %v566, 4
    %v568 = vadd.f32 %v566, %v567
    %v569 = vrot.slane %v568, 2
    %v570 = vadd.f32 %v568, %v569
    %v571 = vrot.slane %v570, 1
    %v572 = vadd.f32 %v570, %v571
    %v573 = vsub.f32 %v565, %v572
    %v574 = vmul.f32 %v559, %v545
    %v575 = vrot.slane %v574, 4
    %v576 = vadd.f32 %v574, %v575
    %v577 = vrot.slane %v576, 2
    %v578 = vadd.f32 %v576, %v577
    %v579 = vrot.slane %v578, 1
    %v580 = vadd.f32 %v578, %v579
    %v581 = vsub.f32 1.0, %v580
    %v582 = vlog2.pop %v581
    %v583 = vmul.f32 %v582, 0.6931472
    %v584 = vadd.f32 %v573, %v583
    %585 = vst [vmem:[#allocation4] sm:$0x1] %v584
    // Predicated region
    $region22: #{tpu_custom_call.1} parent=1 // pred_check
      _
    $region23: #{tpu_custom_call.1} parent=1 // pred_check_branch
      %587 = sbr.rel (0) target = $region25
    $region24: #{tpu_custom_call.1} parent=1 // pred_region
      %589 = vsyncadd [#allocation5], 0
      %s591 = sshll.u32 [#allocation4], 4
      %s592 = int_to_ptr.vmem [resolvable:$true] %s591
      %s593 = sshll.u32 %s5, 4
      %s594 = int_to_ptr.hbm [resolvable:$true] %s593
      %596 = dma.vmem_to_hbm [thread:$0]  %s592, 16, %s594, [#allocation5]
    $region25: #{tpu_custom_call.1} parent=1 // pred_fallthru
      _
    // Predicated region
    $region26: #{tpu_custom_call.1} parent=1 // pred_check
      _
    $region27: #{tpu_custom_call.1} parent=1 // pred_check_branch
      %598 = sbr.rel (0) target = $region29
    $region28: #{tpu_custom_call.1} parent=1 // pred_region
      %600 = dma.done [#allocation5], 16
    $region29: #{tpu_custom_call.1} parent=1 // pred_fallthru
      _
    %601 = vsyncpa [#allocation5], 1

</llo_original>
